<compile_context>
chip_gen: v5e
topology: v5e:2x2
jax: 0.10.0
libtpu: 0.0.40
codegen_flags: <defaults>
</compile_context>

<pallas_src>
import functools

import jax
import jax.numpy as jnp
from jax.experimental import pallas as pl
from jax.experimental.pallas import tpu as pltpu


# ------------------------------ fused kernel ---------------------------------

def make_combiner_kernel(num_nodes, num_edges, n_enc, n_ff_rest):
    """Build the fused forward kernel for a fixed (static) layer structure."""

    def kernel(edge_ref, x_ref, img_ref, per_ref, *refs):
        o_ref = refs[-1]
        p = refs[:-1]

        f32 = jnp.float32
        N = num_nodes
        E = num_edges

        # ---- unpack parameter refs (static structure) ----
        gcn1_w, gcn1_b, gcn2_w, gcn2_b = p[0], p[1], p[2], p[3]
        idx = 4
        enc_layers = []
        for _ in range(n_enc):
            enc_layers.append((p[idx], p[idx + 1]))
            idx += 2
        ff0_w_img, ff0_w_sg, ff0_w_per, ff0_b = p[idx], p[idx + 1], p[idx + 2], p[idx + 3]
        idx += 4
        ff_rest = []
        for _ in range(n_ff_rest):
            ff_rest.append((p[idx], p[idx + 1]))
            idx += 2

        # ---- build normalized adjacency A_hat entirely in VMEM ----
        # A[s, d] = 1 for every edge (set semantics, duplicates idempotent),
        # then add self-loops:  A_hat = D^-1/2 (A + I) D^-1/2.
        ri = jax.lax.broadcasted_iota(jnp.int32, (N, N), 0)
        ci = jax.lax.broadcasted_iota(jnp.int32, (N, N), 1)
        a = jnp.zeros((N, N), f32)
        for e in range(E):  # E is tiny and static; pure VPU compares
            s = edge_ref[0, e]
            d = edge_ref[1, e]
            hit = jnp.logical_and(ri == s, ci == d).astype(f32)
            a = jnp.maximum(a, hit)
        eye = (ri == ci).astype(f32)
        a = a + eye

        # Row/column degree normalisation.  Scene graphs are undirected
        # (edge_index contains both directions), so A+I is symmetric and the
        # two reductions are identical; doing both avoids an in-kernel
        # transpose of a tiny vector.
        deg_row = jnp.sum(a, axis=1, keepdims=True)          # (N, 1)
        deg_col = jnp.sum(a, axis=0, keepdims=True)          # (1, N)
        a_hat = a * jax.lax.rsqrt(deg_row) * jax.lax.rsqrt(deg_col)

        # ---- GNN block: 2x GCNConv (ReLU) + global mean pool ----
        h = jnp.dot(a_hat, x_ref[...], preferred_element_type=f32)
        h = jnp.maximum(
            jnp.dot(h, gcn1_w[...], preferred_element_type=f32) + gcn1_b[...], 0.0)
        h = jnp.dot(a_hat, h, preferred_element_type=f32)
        h = jnp.maximum(
            jnp.dot(h, gcn2_w[...], preferred_element_type=f32) + gcn2_b[...], 0.0)
        pool = jnp.full((1, N), 1.0 / N, dtype=f32)
        sg = jnp.dot(pool, h, preferred_element_type=f32)    # (1, sg_emb)

        # ---- image-embedding encoder MLP ----
        e = img_ref[...]
        for w, b in enc_layers:
            e = jnp.maximum(
                jnp.dot(e, w[...], preferred_element_type=f32) + b[...], 0.0)

        # ---- concat-free first feed-forward layer ----
        z = (jnp.dot(e, ff0_w_img[...], preferred_element_type=f32)
             + jnp.dot(sg, ff0_w_sg[...], preferred_element_type=f32)
             + jnp.dot(per_ref[...], ff0_w_per[...], preferred_element_type=f32)
             + ff0_b[...])
        if n_ff_rest > 0:                 # ReLU unless this is already the output layer
            z = jnp.maximum(z, 0.0)

        # ---- remaining feed-forward layers (no activation on the logits) ----
        for li, (w, b) in enumerate(ff_rest):
            z = jnp.dot(z, w[...], preferred_element_type=f32) + b[...]
            if li < n_ff_rest - 1:
                z = jnp.maximum(z, 0.0)

        o_ref[...] = z.astype(o_ref.dtype)

    return kernel


# ----------------------------- parameter setup --------------------------------

def _uniform_init(key, shape, fan_in):
    scale = 1.0 / jnp.sqrt(jnp.float32(fan_in))
    return jax.random.uniform(key, shape, jnp.float32, -scale, scale)


def _dense_init(key, fan_in, fan_out):
    kw, kb = jax.random.split(key)
    w = _uniform_init(kw, (fan_in, fan_out), fan_in)
    b = _uniform_init(kb, (1, fan_out), fan_in)
    return w, b


def init_params(key, cfg):
    (n_sg_feat, sg_emb, img_emb, red_img, enc_hidden,
     n_classes, n_periph, ff_hidden) = cfg

    keys = jax.random.split(key, 32)
    ki = iter(keys)

    params = {}
    # GNN block: two GCN layers.
    params["gcn1"] = _dense_init(next(ki), n_sg_feat, sg_emb)
    params["gcn2"] = _dense_init(next(ki), sg_emb, sg_emb)

    # Image-embedding encoder: img_emb -> enc_hidden... -> red_img (ReLU).
    enc_dims = [img_emb] + list(enc_hidden) + [red_img]
    params["encoder"] = [
        _dense_init(next(ki), enc_dims[i], enc_dims[i + 1])
        for i in range(len(enc_dims) - 1)
    ]

    # Feed-forward head on concat([reducedImg, sgEmb, peripheral]).
    concat_dim = red_img + sg_emb + n_periph
    ff_dims = [concat_dim] + list(ff_hidden) + [n_classes]
    # First layer stored pre-split into three row blocks so the kernel never
    # materialises the concatenated (1, concat_dim) tensor.
    kw, kb = jax.random.split(next(ki))
    w0 = _uniform_init(kw, (concat_dim, ff_dims[1]), concat_dim)
    params["ffnn0"] = {
        "w_img": w0[:red_img],
        "w_sg":  w0[red_img:red_img + sg_emb],
        "w_per": w0[red_img + sg_emb:],
        "b":     _uniform_init(kb, (1, ff_dims[1]), concat_dim),
    }
    params["ffnn_rest"] = [
        _dense_init(next(ki), ff_dims[i], ff_dims[i + 1])
        for i in range(1, len(ff_dims) - 1)
    ]
    return params


# ----------------------------- forward pass -----------------------------------

def combiner_forward(params, node_x, edge_index, img_embedding, peripheral):
    num_nodes = node_x.shape[0]
    num_edges = edge_index.shape[1]

    enc = params["encoder"]
    ff0 = params["ffnn0"]
    ff_rest = params["ffnn_rest"]

    flat = [params["gcn1"][0], params["gcn1"][1],
            params["gcn2"][0], params["gcn2"][1]]
    for w, b in enc:
        flat += [w, b]
    flat += [ff0["w_img"], ff0["w_sg"], ff0["w_per"], ff0["b"]]
    for w, b in ff_rest:
        flat += [w, b]

    n_out = ff_rest[-1][0].shape[1] if ff_rest else ff0["b"].shape[1]

    kernel = make_combiner_kernel(num_nodes=num_nodes, num_edges=num_edges,
                                  n_enc=len(enc), n_ff_rest=len(ff_rest))

    vmem = pl.BlockSpec(memory_space=pltpu.MemorySpace.VMEM)
    smem = pl.BlockSpec(memory_space=pltpu.MemorySpace.SMEM)
    in_specs = [smem, vmem, vmem, vmem] + [vmem] * len(flat)

    return pl.pallas_call(
        kernel,
        out_shape=jax.ShapeDtypeStruct((1, n_out), jnp.float32),
        in_specs=in_specs,
        out_specs=vmem,
    )(edge_index.astype(jnp.int32), node_x, img_embedding, peripheral, *flat)


# --------------------------------- main ----------------------------------------

if __name__ == "__main__":
    # Small, forward-consistent configuration.
    numSceneGraphFeatures = 16
    sceneGraphEmbeddingSize = 32
    imgEmbeddingSize = 64
    reducedImgEmbeddingSize = 16
    encoderHiddenLayers = [32]
    numClasses = 5
    n_peripheralInputs = 8
    feedForwardHiddenLayers = [32, 16]

    cfg = (numSceneGraphFeatures, sceneGraphEmbeddingSize, imgEmbeddingSize,
           reducedImgEmbeddingSize, encoderHiddenLayers, numClasses,
           n_peripheralInputs, feedForwardHiddenLayers)

    key = jax.random.PRNGKey(0)
    k_params, k_x, k_img, k_per = jax.random.split(key, 4)

    params = init_params(k_params, cfg)

    # Scene graph: 8 nodes on a bidirectional chain.
    num_nodes = 8
    node_x = jax.random.normal(k_x, (num_nodes, numSceneGraphFeatures),
                               jnp.float32)
    src = jnp.arange(num_nodes - 1, dtype=jnp.int32)
    dst = src + 1
    edge_index = jnp.stack([jnp.concatenate([src, dst]),
                            jnp.concatenate([dst, src])], axis=0)  # [2, 14]

    img_embedding = jax.random.normal(k_img, (1, imgEmbeddingSize), jnp.float32)
    peripheral = jax.random.normal(k_per, (1, n_peripheralInputs), jnp.float32)

    fwd = jax.jit(combiner_forward)
    logits = fwd(params, node_x, edge_index, img_embedding, peripheral)
    jax.block_until_ready(logits)

    assert logits.shape == (1, numClasses)
    assert jnp.all(jnp.isfinite(logits))
    print("KERNEL_OK")
</pallas_src>

<mosaic_0001>
module attributes {stable_mosaic.version = 11 : i64} {
  func.func @kernel(%arg0: memref<2x14xi32, #tpu.memory_space<smem>>, %arg1: memref<8x16xf32, #tpu.memory_space<vmem>>, %arg2: memref<1x64xf32, #tpu.memory_space<vmem>>, %arg3: memref<1x8xf32, #tpu.memory_space<vmem>>, %arg4: memref<16x32xf32, #tpu.memory_space<vmem>>, %arg5: memref<1x32xf32, #tpu.memory_space<vmem>>, %arg6: memref<32x32xf32, #tpu.memory_space<vmem>>, %arg7: memref<1x32xf32, #tpu.memory_space<vmem>>, %arg8: memref<64x32xf32, #tpu.memory_space<vmem>>, %arg9: memref<1x32xf32, #tpu.memory_space<vmem>>, %arg10: memref<32x16xf32, #tpu.memory_space<vmem>>, %arg11: memref<1x16xf32, #tpu.memory_space<vmem>>, %arg12: memref<16x32xf32, #tpu.memory_space<vmem>>, %arg13: memref<32x32xf32, #tpu.memory_space<vmem>>, %arg14: memref<8x32xf32, #tpu.memory_space<vmem>>, %arg15: memref<1x32xf32, #tpu.memory_space<vmem>>, %arg16: memref<32x16xf32, #tpu.memory_space<vmem>>, %arg17: memref<1x16xf32, #tpu.memory_space<vmem>>, %arg18: memref<16x5xf32, #tpu.memory_space<vmem>>, %arg19: memref<1x5xf32, #tpu.memory_space<vmem>>, %arg20: memref<1x5xf32, #tpu.memory_space<vmem>>) attributes {dimension_semantics = [], scalar_prefetch = 0 : i64, scratch_operands = 0 : i64, tpu.core_type = #tpu.core_type<tc>} {
    %0 = tpu.iota {dimensions = array<i32: 0>} : vector<8x8xi32>
    %1 = tpu.iota {dimensions = array<i32: 1>} : vector<8x8xi32>
    %cst = arith.constant 0.000000e+00 : f32
    %2 = vector.broadcast %cst : f32 to vector<8x8xf32>
    %c0 = arith.constant 0 : index
    %c0_0 = arith.constant 0 : index
    %3 = memref.load %arg0[%c0, %c0_0] : memref<2x14xi32, #tpu.memory_space<smem>>
    %c1 = arith.constant 1 : index
    %c0_1 = arith.constant 0 : index
    %4 = memref.load %arg0[%c1, %c0_1] : memref<2x14xi32, #tpu.memory_space<smem>>
    %5 = vector.broadcast %3 : i32 to vector<8x8xi32>
    %6 = arith.cmpi eq, %0, %5 : vector<8x8xi32>
    %7 = vector.broadcast %4 : i32 to vector<8x8xi32>
    %8 = arith.cmpi eq, %1, %7 : vector<8x8xi32>
    %9 = arith.andi %6, %8 : vector<8x8xi1>
    %10 = arith.extui %9 : vector<8x8xi1> to vector<8x8xi32>
    %11 = arith.sitofp %10 : vector<8x8xi32> to vector<8x8xf32>
    %12 = arith.maximumf %2, %11 : vector<8x8xf32>
    %c0_2 = arith.constant 0 : index
    %c1_3 = arith.constant 1 : index
    %13 = memref.load %arg0[%c0_2, %c1_3] : memref<2x14xi32, #tpu.memory_space<smem>>
    %c1_4 = arith.constant 1 : index
    %c1_5 = arith.constant 1 : index
    %14 = memref.load %arg0[%c1_4, %c1_5] : memref<2x14xi32, #tpu.memory_space<smem>>
    %15 = vector.broadcast %13 : i32 to vector<8x8xi32>
    %16 = arith.cmpi eq, %0, %15 : vector<8x8xi32>
    %17 = vector.broadcast %14 : i32 to vector<8x8xi32>
    %18 = arith.cmpi eq, %1, %17 : vector<8x8xi32>
    %19 = arith.andi %16, %18 : vector<8x8xi1>
    %20 = arith.extui %19 : vector<8x8xi1> to vector<8x8xi32>
    %21 = arith.sitofp %20 : vector<8x8xi32> to vector<8x8xf32>
    %22 = arith.maximumf %12, %21 : vector<8x8xf32>
    %c0_6 = arith.constant 0 : index
    %c2 = arith.constant 2 : index
    %23 = memref.load %arg0[%c0_6, %c2] : memref<2x14xi32, #tpu.memory_space<smem>>
    %c1_7 = arith.constant 1 : index
    %c2_8 = arith.constant 2 : index
    %24 = memref.load %arg0[%c1_7, %c2_8] : memref<2x14xi32, #tpu.memory_space<smem>>
    %25 = vector.broadcast %23 : i32 to vector<8x8xi32>
    %26 = arith.cmpi eq, %0, %25 : vector<8x8xi32>
    %27 = vector.broadcast %24 : i32 to vector<8x8xi32>
    %28 = arith.cmpi eq, %1, %27 : vector<8x8xi32>
    %29 = arith.andi %26, %28 : vector<8x8xi1>
    %30 = arith.extui %29 : vector<8x8xi1> to vector<8x8xi32>
    %31 = arith.sitofp %30 : vector<8x8xi32> to vector<8x8xf32>
    %32 = arith.maximumf %22, %31 : vector<8x8xf32>
    %c0_9 = arith.constant 0 : index
    %c3 = arith.constant 3 : index
    %33 = memref.load %arg0[%c0_9, %c3] : memref<2x14xi32, #tpu.memory_space<smem>>
    %c1_10 = arith.constant 1 : index
    %c3_11 = arith.constant 3 : index
    %34 = memref.load %arg0[%c1_10, %c3_11] : memref<2x14xi32, #tpu.memory_space<smem>>
    %35 = vector.broadcast %33 : i32 to vector<8x8xi32>
    %36 = arith.cmpi eq, %0, %35 : vector<8x8xi32>
    %37 = vector.broadcast %34 : i32 to vector<8x8xi32>
    %38 = arith.cmpi eq, %1, %37 : vector<8x8xi32>
    %39 = arith.andi %36, %38 : vector<8x8xi1>
    %40 = arith.extui %39 : vector<8x8xi1> to vector<8x8xi32>
    %41 = arith.sitofp %40 : vector<8x8xi32> to vector<8x8xf32>
    %42 = arith.maximumf %32, %41 : vector<8x8xf32>
    %c0_12 = arith.constant 0 : index
    %c4 = arith.constant 4 : index
    %43 = memref.load %arg0[%c0_12, %c4] : memref<2x14xi32, #tpu.memory_space<smem>>
    %c1_13 = arith.constant 1 : index
    %c4_14 = arith.constant 4 : index
    %44 = memref.load %arg0[%c1_13, %c4_14] : memref<2x14xi32, #tpu.memory_space<smem>>
    %45 = vector.broadcast %43 : i32 to vector<8x8xi32>
    %46 = arith.cmpi eq, %0, %45 : vector<8x8xi32>
    %47 = vector.broadcast %44 : i32 to vector<8x8xi32>
    %48 = arith.cmpi eq, %1, %47 : vector<8x8xi32>
    %49 = arith.andi %46, %48 : vector<8x8xi1>
    %50 = arith.extui %49 : vector<8x8xi1> to vector<8x8xi32>
    %51 = arith.sitofp %50 : vector<8x8xi32> to vector<8x8xf32>
    %52 = arith.maximumf %42, %51 : vector<8x8xf32>
    %c0_15 = arith.constant 0 : index
    %c5 = arith.constant 5 : index
    %53 = memref.load %arg0[%c0_15, %c5] : memref<2x14xi32, #tpu.memory_space<smem>>
    %c1_16 = arith.constant 1 : index
    %c5_17 = arith.constant 5 : index
    %54 = memref.load %arg0[%c1_16, %c5_17] : memref<2x14xi32, #tpu.memory_space<smem>>
    %55 = vector.broadcast %53 : i32 to vector<8x8xi32>
    %56 = arith.cmpi eq, %0, %55 : vector<8x8xi32>
    %57 = vector.broadcast %54 : i32 to vector<8x8xi32>
    %58 = arith.cmpi eq, %1, %57 : vector<8x8xi32>
    %59 = arith.andi %56, %58 : vector<8x8xi1>
    %60 = arith.extui %59 : vector<8x8xi1> to vector<8x8xi32>
    %61 = arith.sitofp %60 : vector<8x8xi32> to vector<8x8xf32>
    %62 = arith.maximumf %52, %61 : vector<8x8xf32>
    %c0_18 = arith.constant 0 : index
    %c6 = arith.constant 6 : index
    %63 = memref.load %arg0[%c0_18, %c6] : memref<2x14xi32, #tpu.memory_space<smem>>
    %c1_19 = arith.constant 1 : index
    %c6_20 = arith.constant 6 : index
    %64 = memref.load %arg0[%c1_19, %c6_20] : memref<2x14xi32, #tpu.memory_space<smem>>
    %65 = vector.broadcast %63 : i32 to vector<8x8xi32>
    %66 = arith.cmpi eq, %0, %65 : vector<8x8xi32>
    %67 = vector.broadcast %64 : i32 to vector<8x8xi32>
    %68 = arith.cmpi eq, %1, %67 : vector<8x8xi32>
    %69 = arith.andi %66, %68 : vector<8x8xi1>
    %70 = arith.extui %69 : vector<8x8xi1> to vector<8x8xi32>
    %71 = arith.sitofp %70 : vector<8x8xi32> to vector<8x8xf32>
    %72 = arith.maximumf %62, %71 : vector<8x8xf32>
    %c0_21 = arith.constant 0 : index
    %c7 = arith.constant 7 : index
    %73 = memref.load %arg0[%c0_21, %c7] : memref<2x14xi32, #tpu.memory_space<smem>>
    %c1_22 = arith.constant 1 : index
    %c7_23 = arith.constant 7 : index
    %74 = memref.load %arg0[%c1_22, %c7_23] : memref<2x14xi32, #tpu.memory_space<smem>>
    %75 = vector.broadcast %73 : i32 to vector<8x8xi32>
    %76 = arith.cmpi eq, %0, %75 : vector<8x8xi32>
    %77 = vector.broadcast %74 : i32 to vector<8x8xi32>
    %78 = arith.cmpi eq, %1, %77 : vector<8x8xi32>
    %79 = arith.andi %76, %78 : vector<8x8xi1>
    %80 = arith.extui %79 : vector<8x8xi1> to vector<8x8xi32>
    %81 = arith.sitofp %80 : vector<8x8xi32> to vector<8x8xf32>
    %82 = arith.maximumf %72, %81 : vector<8x8xf32>
    %c0_24 = arith.constant 0 : index
    %c8 = arith.constant 8 : index
    %83 = memref.load %arg0[%c0_24, %c8] : memref<2x14xi32, #tpu.memory_space<smem>>
    %c1_25 = arith.constant 1 : index
    %c8_26 = arith.constant 8 : index
    %84 = memref.load %arg0[%c1_25, %c8_26] : memref<2x14xi32, #tpu.memory_space<smem>>
    %85 = vector.broadcast %83 : i32 to vector<8x8xi32>
    %86 = arith.cmpi eq, %0, %85 : vector<8x8xi32>
    %87 = vector.broadcast %84 : i32 to vector<8x8xi32>
    %88 = arith.cmpi eq, %1, %87 : vector<8x8xi32>
    %89 = arith.andi %86, %88 : vector<8x8xi1>
    %90 = arith.extui %89 : vector<8x8xi1> to vector<8x8xi32>
    %91 = arith.sitofp %90 : vector<8x8xi32> to vector<8x8xf32>
    %92 = arith.maximumf %82, %91 : vector<8x8xf32>
    %c0_27 = arith.constant 0 : index
    %c9 = arith.constant 9 : index
    %93 = memref.load %arg0[%c0_27, %c9] : memref<2x14xi32, #tpu.memory_space<smem>>
    %c1_28 = arith.constant 1 : index
    %c9_29 = arith.constant 9 : index
    %94 = memref.load %arg0[%c1_28, %c9_29] : memref<2x14xi32, #tpu.memory_space<smem>>
    %95 = vector.broadcast %93 : i32 to vector<8x8xi32>
    %96 = arith.cmpi eq, %0, %95 : vector<8x8xi32>
    %97 = vector.broadcast %94 : i32 to vector<8x8xi32>
    %98 = arith.cmpi eq, %1, %97 : vector<8x8xi32>
    %99 = arith.andi %96, %98 : vector<8x8xi1>
    %100 = arith.extui %99 : vector<8x8xi1> to vector<8x8xi32>
    %101 = arith.sitofp %100 : vector<8x8xi32> to vector<8x8xf32>
    %102 = arith.maximumf %92, %101 : vector<8x8xf32>
    %c0_30 = arith.constant 0 : index
    %c10 = arith.constant 10 : index
    %103 = memref.load %arg0[%c0_30, %c10] : memref<2x14xi32, #tpu.memory_space<smem>>
    %c1_31 = arith.constant 1 : index
    %c10_32 = arith.constant 10 : index
    %104 = memref.load %arg0[%c1_31, %c10_32] : memref<2x14xi32, #tpu.memory_space<smem>>
    %105 = vector.broadcast %103 : i32 to vector<8x8xi32>
    %106 = arith.cmpi eq, %0, %105 : vector<8x8xi32>
    %107 = vector.broadcast %104 : i32 to vector<8x8xi32>
    %108 = arith.cmpi eq, %1, %107 : vector<8x8xi32>
    %109 = arith.andi %106, %108 : vector<8x8xi1>
    %110 = arith.extui %109 : vector<8x8xi1> to vector<8x8xi32>
    %111 = arith.sitofp %110 : vector<8x8xi32> to vector<8x8xf32>
    %112 = arith.maximumf %102, %111 : vector<8x8xf32>
    %c0_33 = arith.constant 0 : index
    %c11 = arith.constant 11 : index
    %113 = memref.load %arg0[%c0_33, %c11] : memref<2x14xi32, #tpu.memory_space<smem>>
    %c1_34 = arith.constant 1 : index
    %c11_35 = arith.constant 11 : index
    %114 = memref.load %arg0[%c1_34, %c11_35] : memref<2x14xi32, #tpu.memory_space<smem>>
    %115 = vector.broadcast %113 : i32 to vector<8x8xi32>
    %116 = arith.cmpi eq, %0, %115 : vector<8x8xi32>
    %117 = vector.broadcast %114 : i32 to vector<8x8xi32>
    %118 = arith.cmpi eq, %1, %117 : vector<8x8xi32>
    %119 = arith.andi %116, %118 : vector<8x8xi1>
    %120 = arith.extui %119 : vector<8x8xi1> to vector<8x8xi32>
    %121 = arith.sitofp %120 : vector<8x8xi32> to vector<8x8xf32>
    %122 = arith.maximumf %112, %121 : vector<8x8xf32>
    %c0_36 = arith.constant 0 : index
    %c12 = arith.constant 12 : index
    %123 = memref.load %arg0[%c0_36, %c12] : memref<2x14xi32, #tpu.memory_space<smem>>
    %c1_37 = arith.constant 1 : index
    %c12_38 = arith.constant 12 : index
    %124 = memref.load %arg0[%c1_37, %c12_38] : memref<2x14xi32, #tpu.memory_space<smem>>
    %125 = vector.broadcast %123 : i32 to vector<8x8xi32>
    %126 = arith.cmpi eq, %0, %125 : vector<8x8xi32>
    %127 = vector.broadcast %124 : i32 to vector<8x8xi32>
    %128 = arith.cmpi eq, %1, %127 : vector<8x8xi32>
    %129 = arith.andi %126, %128 : vector<8x8xi1>
    %130 = arith.extui %129 : vector<8x8xi1> to vector<8x8xi32>
    %131 = arith.sitofp %130 : vector<8x8xi32> to vector<8x8xf32>
    %132 = arith.maximumf %122, %131 : vector<8x8xf32>
    %c0_39 = arith.constant 0 : index
    %c13 = arith.constant 13 : index
    %133 = memref.load %arg0[%c0_39, %c13] : memref<2x14xi32, #tpu.memory_space<smem>>
    %c1_40 = arith.constant 1 : index
    %c13_41 = arith.constant 13 : index
    %134 = memref.load %arg0[%c1_40, %c13_41] : memref<2x14xi32, #tpu.memory_space<smem>>
    %135 = vector.broadcast %133 : i32 to vector<8x8xi32>
    %136 = arith.cmpi eq, %0, %135 : vector<8x8xi32>
    %137 = vector.broadcast %134 : i32 to vector<8x8xi32>
    %138 = arith.cmpi eq, %1, %137 : vector<8x8xi32>
    %139 = arith.andi %136, %138 : vector<8x8xi1>
    %140 = arith.extui %139 : vector<8x8xi1> to vector<8x8xi32>
    %141 = arith.sitofp %140 : vector<8x8xi32> to vector<8x8xf32>
    %142 = arith.maximumf %132, %141 : vector<8x8xf32>
    %143 = arith.cmpi eq, %0, %1 : vector<8x8xi32>
    %144 = arith.extui %143 : vector<8x8xi1> to vector<8x8xi32>
    %145 = arith.sitofp %144 : vector<8x8xi32> to vector<8x8xf32>
    %146 = arith.addf %142, %145 : vector<8x8xf32>
    %cst_42 = arith.constant dense<0.000000e+00> : vector<8xf32>
    %147 = vector.multi_reduction <add>, %146, %cst_42 [1] : vector<8x8xf32> to vector<8xf32>
    %148 = vector.shape_cast %147 : vector<8xf32> to vector<8x1xf32>
    %cst_43 = arith.constant dense<0.000000e+00> : vector<8xf32>
    %149 = vector.multi_reduction <add>, %146, %cst_43 [0] : vector<8x8xf32> to vector<8xf32>
    %150 = vector.shape_cast %149 : vector<8xf32> to vector<1x8xf32>
    %151 = math.rsqrt %148 : vector<8x1xf32>
    %152 = vector.broadcast %151 : vector<8x1xf32> to vector<8x8xf32>
    %153 = arith.mulf %146, %152 : vector<8x8xf32>
    %154 = math.rsqrt %150 : vector<1x8xf32>
    %155 = vector.broadcast %154 : vector<1x8xf32> to vector<8x8xf32>
    %156 = arith.mulf %153, %155 : vector<8x8xf32>
    %c0_44 = arith.constant 0 : index
    %c0_45 = arith.constant 0 : index
    %157 = vector.load %arg1[%c0_44, %c0_45] : memref<8x16xf32, #tpu.memory_space<vmem>>, vector<8x16xf32>
    %cst_46 = arith.constant dense<0.000000e+00> : vector<8x16xf32>
    %158 = tpu.matmul %156, %157, %cst_46 {dimension_numbers = #tpu.dot_dimension_numbers<[1], [0], [0], [1], [0, 0, 1, 1], [], []>} : vector<8x8xf32>, vector<8x16xf32>, vector<8x16xf32> -> vector<8x16xf32>
    %c0_47 = arith.constant 0 : index
    %c0_48 = arith.constant 0 : index
    %159 = vector.load %arg4[%c0_47, %c0_48] : memref<16x32xf32, #tpu.memory_space<vmem>>, vector<16x32xf32>
    %cst_49 = arith.constant dense<0.000000e+00> : vector<8x32xf32>
    %160 = tpu.matmul %158, %159, %cst_49 {dimension_numbers = #tpu.dot_dimension_numbers<[1], [0], [0], [1], [0, 0, 1, 1], [], []>} : vector<8x16xf32>, vector<16x32xf32>, vector<8x32xf32> -> vector<8x32xf32>
    %c0_50 = arith.constant 0 : index
    %c0_51 = arith.constant 0 : index
    %161 = vector.load %arg5[%c0_50, %c0_51] : memref<1x32xf32, #tpu.memory_space<vmem>>, vector<1x32xf32>
    %162 = vector.broadcast %161 : vector<1x32xf32> to vector<8x32xf32>
    %163 = arith.addf %160, %162 : vector<8x32xf32>
    %cst_52 = arith.constant 0.000000e+00 : f32
    %164 = vector.broadcast %cst_52 : f32 to vector<8x32xf32>
    %165 = arith.maximumf %163, %164 : vector<8x32xf32>
    %cst_53 = arith.constant dense<0.000000e+00> : vector<8x32xf32>
    %166 = tpu.matmul %156, %165, %cst_53 {dimension_numbers = #tpu.dot_dimension_numbers<[1], [0], [0], [1], [0, 0, 1, 1], [], []>} : vector<8x8xf32>, vector<8x32xf32>, vector<8x32xf32> -> vector<8x32xf32>
    %c0_54 = arith.constant 0 : index
    %c0_55 = arith.constant 0 : index
    %167 = vector.load %arg6[%c0_54, %c0_55] : memref<32x32xf32, #tpu.memory_space<vmem>>, vector<32x32xf32>
    %cst_56 = arith.constant dense<0.000000e+00> : vector<8x32xf32>
    %168 = tpu.matmul %166, %167, %cst_56 {dimension_numbers = #tpu.dot_dimension_numbers<[1], [0], [0], [1], [0, 0, 1, 1], [], []>} : vector<8x32xf32>, vector<32x32xf32>, vector<8x32xf32> -> vector<8x32xf32>
    %c0_57 = arith.constant 0 : index
    %c0_58 = arith.constant 0 : index
    %169 = vector.load %arg7[%c0_57, %c0_58] : memref<1x32xf32, #tpu.memory_space<vmem>>, vector<1x32xf32>
    %170 = vector.broadcast %169 : vector<1x32xf32> to vector<8x32xf32>
    %171 = arith.addf %168, %170 : vector<8x32xf32>
    %cst_59 = arith.constant 0.000000e+00 : f32
    %172 = vector.broadcast %cst_59 : f32 to vector<8x32xf32>
    %173 = arith.maximumf %171, %172 : vector<8x32xf32>
    %cst_60 = arith.constant 1.250000e-01 : f32
    %174 = vector.broadcast %cst_60 : f32 to vector<1x8xf32>
    %cst_61 = arith.constant dense<0.000000e+00> : vector<1x32xf32>
    %175 = tpu.matmul %174, %173, %cst_61 {dimension_numbers = #tpu.dot_dimension_numbers<[1], [0], [0], [1], [0, 0, 1, 1], [], []>} : vector<1x8xf32>, vector<8x32xf32>, vector<1x32xf32> -> vector<1x32xf32>
    %c0_62 = arith.constant 0 : index
    %c0_63 = arith.constant 0 : index
    %176 = vector.load %arg2[%c0_62, %c0_63] : memref<1x64xf32, #tpu.memory_space<vmem>>, vector<1x64xf32>
    %c0_64 = arith.constant 0 : index
    %c0_65 = arith.constant 0 : index
    %177 = vector.load %arg8[%c0_64, %c0_65] : memref<64x32xf32, #tpu.memory_space<vmem>>, vector<64x32xf32>
    %cst_66 = arith.constant dense<0.000000e+00> : vector<1x32xf32>
    %178 = tpu.matmul %176, %177, %cst_66 {dimension_numbers = #tpu.dot_dimension_numbers<[1], [0], [0], [1], [0, 0, 1, 1], [], []>} : vector<1x64xf32>, vector<64x32xf32>, vector<1x32xf32> -> vector<1x32xf32>
    %c0_67 = arith.constant 0 : index
    %c0_68 = arith.constant 0 : index
    %179 = vector.load %arg9[%c0_67, %c0_68] : memref<1x32xf32, #tpu.memory_space<vmem>>, vector<1x32xf32>
    %180 = arith.addf %178, %179 : vector<1x32xf32>
    %cst_69 = arith.constant 0.000000e+00 : f32
    %181 = vector.broadcast %cst_69 : f32 to vector<1x32xf32>
    %182 = arith.maximumf %180, %181 : vector<1x32xf32>
    %c0_70 = arith.constant 0 : index
    %c0_71 = arith.constant 0 : index
    %183 = vector.load %arg10[%c0_70, %c0_71] : memref<32x16xf32, #tpu.memory_space<vmem>>, vector<32x16xf32>
    %cst_72 = arith.constant dense<0.000000e+00> : vector<1x16xf32>
    %184 = tpu.matmul %182, %183, %cst_72 {dimension_numbers = #tpu.dot_dimension_numbers<[1], [0], [0], [1], [0, 0, 1, 1], [], []>} : vector<1x32xf32>, vector<32x16xf32>, vector<1x16xf32> -> vector<1x16xf32>
    %c0_73 = arith.constant 0 : index
    %c0_74 = arith.constant 0 : index
    %185 = vector.load %arg11[%c0_73, %c0_74] : memref<1x16xf32, #tpu.memory_space<vmem>>, vector<1x16xf32>
    %186 = arith.addf %184, %185 : vector<1x16xf32>
    %cst_75 = arith.constant 0.000000e+00 : f32
    %187 = vector.broadcast %cst_75 : f32 to vector<1x16xf32>
    %188 = arith.maximumf %186, %187 : vector<1x16xf32>
    %c0_76 = arith.constant 0 : index
    %c0_77 = arith.constant 0 : index
    %189 = vector.load %arg12[%c0_76, %c0_77] : memref<16x32xf32, #tpu.memory_space<vmem>>, vector<16x32xf32>
    %cst_78 = arith.constant dense<0.000000e+00> : vector<1x32xf32>
    %190 = tpu.matmul %188, %189, %cst_78 {dimension_numbers = #tpu.dot_dimension_numbers<[1], [0], [0], [1], [0, 0, 1, 1], [], []>} : vector<1x16xf32>, vector<16x32xf32>, vector<1x32xf32> -> vector<1x32xf32>
    %c0_79 = arith.constant 0 : index
    %c0_80 = arith.constant 0 : index
    %191 = vector.load %arg13[%c0_79, %c0_80] : memref<32x32xf32, #tpu.memory_space<vmem>>, vector<32x32xf32>
    %cst_81 = arith.constant dense<0.000000e+00> : vector<1x32xf32>
    %192 = tpu.matmul %175, %191, %cst_81 {dimension_numbers = #tpu.dot_dimension_numbers<[1], [0], [0], [1], [0, 0, 1, 1], [], []>} : vector<1x32xf32>, vector<32x32xf32>, vector<1x32xf32> -> vector<1x32xf32>
    %193 = arith.addf %190, %192 : vector<1x32xf32>
    %c0_82 = arith.constant 0 : index
    %c0_83 = arith.constant 0 : index
    %194 = vector.load %arg3[%c0_82, %c0_83] : memref<1x8xf32, #tpu.memory_space<vmem>>, vector<1x8xf32>
    %c0_84 = arith.constant 0 : index
    %c0_85 = arith.constant 0 : index
    %195 = vector.load %arg14[%c0_84, %c0_85] : memref<8x32xf32, #tpu.memory_space<vmem>>, vector<8x32xf32>
    %cst_86 = arith.constant dense<0.000000e+00> : vector<1x32xf32>
    %196 = tpu.matmul %194, %195, %cst_86 {dimension_numbers = #tpu.dot_dimension_numbers<[1], [0], [0], [1], [0, 0, 1, 1], [], []>} : vector<1x8xf32>, vector<8x32xf32>, vector<1x32xf32> -> vector<1x32xf32>
    %197 = arith.addf %193, %196 : vector<1x32xf32>
    %c0_87 = arith.constant 0 : index
    %c0_88 = arith.constant 0 : index
    %198 = vector.load %arg15[%c0_87, %c0_88] : memref<1x32xf32, #tpu.memory_space<vmem>>, vector<1x32xf32>
    %199 = arith.addf %197, %198 : vector<1x32xf32>
    %cst_89 = arith.constant 0.000000e+00 : f32
    %200 = vector.broadcast %cst_89 : f32 to vector<1x32xf32>
    %201 = arith.maximumf %199, %200 : vector<1x32xf32>
    %c0_90 = arith.constant 0 : index
    %c0_91 = arith.constant 0 : index
    %202 = vector.load %arg16[%c0_90, %c0_91] : memref<32x16xf32, #tpu.memory_space<vmem>>, vector<32x16xf32>
    %cst_92 = arith.constant dense<0.000000e+00> : vector<1x16xf32>
    %203 = tpu.matmul %201, %202, %cst_92 {dimension_numbers = #tpu.dot_dimension_numbers<[1], [0], [0], [1], [0, 0, 1, 1], [], []>} : vector<1x32xf32>, vector<32x16xf32>, vector<1x16xf32> -> vector<1x16xf32>
    %c0_93 = arith.constant 0 : index
    %c0_94 = arith.constant 0 : index
    %204 = vector.load %arg17[%c0_93, %c0_94] : memref<1x16xf32, #tpu.memory_space<vmem>>, vector<1x16xf32>
    %205 = arith.addf %203, %204 : vector<1x16xf32>
    %cst_95 = arith.constant 0.000000e+00 : f32
    %206 = vector.broadcast %cst_95 : f32 to vector<1x16xf32>
    %207 = arith.maximumf %205, %206 : vector<1x16xf32>
    %c0_96 = arith.constant 0 : index
    %c0_97 = arith.constant 0 : index
    %208 = vector.load %arg18[%c0_96, %c0_97] : memref<16x5xf32, #tpu.memory_space<vmem>>, vector<16x5xf32>
    %cst_98 = arith.constant dense<0.000000e+00> : vector<1x5xf32>
    %209 = tpu.matmul %207, %208, %cst_98 {dimension_numbers = #tpu.dot_dimension_numbers<[1], [0], [0], [1], [0, 0, 1, 1], [], []>} : vector<1x16xf32>, vector<16x5xf32>, vector<1x5xf32> -> vector<1x5xf32>
    %c0_99 = arith.constant 0 : index
    %c0_100 = arith.constant 0 : index
    %210 = vector.load %arg19[%c0_99, %c0_100] : memref<1x5xf32, #tpu.memory_space<vmem>>, vector<1x5xf32>
    %211 = arith.addf %209, %210 : vector<1x5xf32>
    %c0_101 = arith.constant 0 : index
    %c0_102 = arith.constant 0 : index
    %212 = vector.load %arg20[%c0_101, %c0_102] : memref<1x5xf32, #tpu.memory_space<vmem>>, vector<1x5xf32>
    tpu.vector_store %arg20[%c0_101, %c0_102], %211 {strides = array<i32>} : memref<1x5xf32, #tpu.memory_space<vmem>>, vector<1x5xf32>,
    return
  }
}

</mosaic_0001>

<llo_original>
// kernel: combiner_forward.1
$region0: #{combiner_forward.1}
  #allocation0 [shape = 'u32[]', space=smem, size = 0x4, offset = 0x4, fixed_abs, tag = 'smem constant byte address 0x4 - core index']
  #allocation1 [shape = 'u32[72,128]{1,0:T(1,128)}', space=vmem, size = 0x9000, scoped, tag = 'internal scratch']
  %s0 = inlined_call_operand.vmem [shape: s32[2,14], index: 0, kind: input, shape index: {}]
  %s1 = inlined_call_operand.vmem [shape: f32[8,16], index: 1, kind: input, shape index: {}]
  %s2 = inlined_call_operand.vmem [shape: f32[1,64], index: 2, kind: input, shape index: {}]
  %s3 = inlined_call_operand.vmem [shape: f32[1,8], index: 3, kind: input, shape index: {}]
  %s4 = inlined_call_operand.vmem [shape: f32[16,32], index: 4, kind: input, shape index: {}]
  %s5 = inlined_call_operand.vmem [shape: f32[1,32], index: 5, kind: input, shape index: {}]
  %s6 = inlined_call_operand.vmem [shape: f32[32,32], index: 6, kind: input, shape index: {}]
  %s7 = inlined_call_operand.vmem [shape: f32[1,32], index: 7, kind: input, shape index: {}]
  %s8 = inlined_call_operand.vmem [shape: f32[64,32], index: 8, kind: input, shape index: {}]
  %s9 = inlined_call_operand.vmem [shape: f32[1,32], index: 9, kind: input, shape index: {}]
  %s10 = inlined_call_operand.vmem [shape: f32[32,16], index: 10, kind: input, shape index: {}]
  %s11 = inlined_call_operand.vmem [shape: f32[1,16], index: 11, kind: input, shape index: {}]
  %s12 = inlined_call_operand.vmem [shape: f32[16,32], index: 12, kind: input, shape index: {}]
  %s13 = inlined_call_operand.vmem [shape: f32[32,32], index: 13, kind: input, shape index: {}]
  %s14 = inlined_call_operand.vmem [shape: f32[8,32], index: 14, kind: input, shape index: {}]
  %s15 = inlined_call_operand.vmem [shape: f32[1,32], index: 15, kind: input, shape index: {}]
  %s16 = inlined_call_operand.vmem [shape: f32[32,16], index: 16, kind: input, shape index: {}]
  %s17 = inlined_call_operand.vmem [shape: f32[1,16], index: 17, kind: input, shape index: {}]
  %s18 = inlined_call_operand.vmem [shape: f32[16,5], index: 18, kind: input, shape index: {}]
  %s19 = inlined_call_operand.vmem [shape: f32[1,5], index: 19, kind: input, shape index: {}]
  %s20 = inlined_call_operand.hbm [shape: f32[1,5], index: 20, kind: output, shape index: {}]
  %s21 = sld [smem:[#allocation0]]
  $region94: #{combiner_forward.1} parent=0
    _
  %s23 = ssub.s32 1, %s21
  %s24 = scalar_select 0, %s23, %s21
  $region1: #{combiner_forward.1} parent=0
    #allocation2 [shape = 'u8[1024]{0}', space=smem, size = 0x400, scoped, tag = 'input window, operand 0, single buffered']
    #allocation3 [shape = 's32[1]{0}', space=sflag, size = 0x4, scoped, tag = 'scoped memory for combiner_forward.1']
    #allocation4 [shape = 's32[1]{0}', space=sflag, size = 0x4, scoped, tag = 'scoped memory for combiner_forward.1']
    #allocation5 [shape = 'u8[512]{0}', space=vmem, size = 0x400, scoped, tag = 'output window, operand 0, single buffered']
    %25 = vsyncpa [#allocation4], 0
    %26 = vsyncpa [#allocation3], 0
    // Predicated region
    $region2: #{combiner_forward.1} parent=1 // pred_check
      _
    $region3: #{combiner_forward.1} parent=1 // pred_check_branch
      %28 = sbr.rel (0) target = $region5
    $region4: #{combiner_forward.1} parent=1 // pred_region
      %30 = vsyncadd [#allocation4], 0
      %s32 = sshll.u32 %s0, 4
      %s33 = int_to_ptr.vmem [resolvable:$true] %s32
      %35 = dma.vmem_to_smem %s33, 32, [#allocation2], [#allocation4]
    $region5: #{combiner_forward.1} parent=1 // pred_fallthru
      _
    // Predicated region
    $region6: #{combiner_forward.1} parent=1 // pred_check
      _
    $region7: #{combiner_forward.1} parent=1 // pred_check_branch
      %37 = sbr.rel (0) target = $region9
    $region8: #{combiner_forward.1} parent=1 // pred_region
      _
    $region9: #{combiner_forward.1} parent=1 // pred_fallthru
      _
    // Predicated region
    $region10: #{combiner_forward.1} parent=1 // pred_check
      _
    $region11: #{combiner_forward.1} parent=1 // pred_check_branch
      %39 = sbr.rel (0) target = $region13
    $region12: #{combiner_forward.1} parent=1 // pred_region
      _
    $region13: #{combiner_forward.1} parent=1 // pred_fallthru
      _
    // Predicated region
    $region14: #{combiner_forward.1} parent=1 // pred_check
      _
    $region15: #{combiner_forward.1} parent=1 // pred_check_branch
      %41 = sbr.rel (0) target = $region17
    $region16: #{combiner_forward.1} parent=1 // pred_region
      _
    $region17: #{combiner_forward.1} parent=1 // pred_fallthru
      _
    // Predicated region
    $region18: #{combiner_forward.1} parent=1 // pred_check
      _
    $region19: #{combiner_forward.1} parent=1 // pred_check_branch
      %43 = sbr.rel (0) target = $region21
    $region20: #{combiner_forward.1} parent=1 // pred_region
      _
    $region21: #{combiner_forward.1} parent=1 // pred_fallthru
      _
    // Predicated region
    $region22: #{combiner_forward.1} parent=1 // pred_check
      _
    $region23: #{combiner_forward.1} parent=1 // pred_check_branch
      %45 = sbr.rel (0) target = $region25
    $region24: #{combiner_forward.1} parent=1 // pred_region
      _
    $region25: #{combiner_forward.1} parent=1 // pred_fallthru
      _
    // Predicated region
    $region26: #{combiner_forward.1} parent=1 // pred_check
      _
    $region27: #{combiner_forward.1} parent=1 // pred_check_branch
      %47 = sbr.rel (0) target = $region29
    $region28: #{combiner_forward.1} parent=1 // pred_region
      _
    $region29: #{combiner_forward.1} parent=1 // pred_fallthru
      _
    // Predicated region
    $region30: #{combiner_forward.1} parent=1 // pred_check
      _
    $region31: #{combiner_forward.1} parent=1 // pred_check_branch
      %49 = sbr.rel (0) target = $region33
    $region32: #{combiner_forward.1} parent=1 // pred_region
      _
    $region33: #{combiner_forward.1} parent=1 // pred_fallthru
      _
    // Predicated region
    $region34: #{combiner_forward.1} parent=1 // pred_check
      _
    $region35: #{combiner_forward.1} parent=1 // pred_check_branch
      %51 = sbr.rel (0) target = $region37
    $region36: #{combiner_forward.1} parent=1 // pred_region
      _
    $region37: #{combiner_forward.1} parent=1 // pred_fallthru
      _
    // Predicated region
    $region38: #{combiner_forward.1} parent=1 // pred_check
      _
    $region39: #{combiner_forward.1} parent=1 // pred_check_branch
      %53 = sbr.rel (0) target = $region41
    $region40: #{combiner_forward.1} parent=1 // pred_region
      _
    $region41: #{combiner_forward.1} parent=1 // pred_fallthru
      _
    // Predicated region
    $region42: #{combiner_forward.1} parent=1 // pred_check
      _
    $region43: #{combiner_forward.1} parent=1 // pred_check_branch
      %55 = sbr.rel (0) target = $region45
    $region44: #{combiner_forward.1} parent=1 // pred_region
      _
    $region45: #{combiner_forward.1} parent=1 // pred_fallthru
      _
    // Predicated region
    $region46: #{combiner_forward.1} parent=1 // pred_check
      _
    $region47: #{combiner_forward.1} parent=1 // pred_check_branch
      %57 = sbr.rel (0) target = $region49
    $region48: #{combiner_forward.1} parent=1 // pred_region
      _
    $region49: #{combiner_forward.1} parent=1 // pred_fallthru
      _
    // Predicated region
    $region50: #{combiner_forward.1} parent=1 // pred_check
      _
    $region51: #{combiner_forward.1} parent=1 // pred_check_branch
      %59 = sbr.rel (0) target = $region53
    $region52: #{combiner_forward.1} parent=1 // pred_region
      _
    $region53: #{combiner_forward.1} parent=1 // pred_fallthru
      _
    // Predicated region
    $region54: #{combiner_forward.1} parent=1 // pred_check
      _
    $region55: #{combiner_forward.1} parent=1 // pred_check_branch
      %61 = sbr.rel (0) target = $region57
    $region56: #{combiner_forward.1} parent=1 // pred_region
      _
    $region57: #{combiner_forward.1} parent=1 // pred_fallthru
      _
    // Predicated region
    $region58: #{combiner_forward.1} parent=1 // pred_check
      _
    $region59: #{combiner_forward.1} parent=1 // pred_check_branch
      %63 = sbr.rel (0) target = $region61
    $region60: #{combiner_forward.1} parent=1 // pred_region
      _
    $region61: #{combiner_forward.1} parent=1 // pred_fallthru
      _
    // Predicated region
    $region62: #{combiner_forward.1} parent=1 // pred_check
      _
    $region63: #{combiner_forward.1} parent=1 // pred_check_branch
      %65 = sbr.rel (0) target = $region65
    $region64: #{combiner_forward.1} parent=1 // pred_region
      _
    $region65: #{combiner_forward.1} parent=1 // pred_fallthru
      _
    // Predicated region
    $region66: #{combiner_forward.1} parent=1 // pred_check
      _
    $region67: #{combiner_forward.1} parent=1 // pred_check_branch
      %67 = sbr.rel (0) target = $region69
    $region68: #{combiner_forward.1} parent=1 // pred_region
      _
    $region69: #{combiner_forward.1} parent=1 // pred_fallthru
      _
    // Predicated region
    $region70: #{combiner_forward.1} parent=1 // pred_check
      _
    $region71: #{combiner_forward.1} parent=1 // pred_check_branch
      %69 = sbr.rel (0) target = $region73
    $region72: #{combiner_forward.1} parent=1 // pred_region
      _
    $region73: #{combiner_forward.1} parent=1 // pred_fallthru
      _
    // Predicated region
    $region74: #{combiner_forward.1} parent=1 // pred_check
      _
    $region75: #{combiner_forward.1} parent=1 // pred_check_branch
      %71 = sbr.rel (0) target = $region77
    $region76: #{combiner_forward.1} parent=1 // pred_region
      _
    $region77: #{combiner_forward.1} parent=1 // pred_fallthru
      _
    // Predicated region
    $region78: #{combiner_forward.1} parent=1 // pred_check
      _
    $region79: #{combiner_forward.1} parent=1 // pred_check_branch
      %73 = sbr.rel (0) target = $region81
    $region80: #{combiner_forward.1} parent=1 // pred_region
      _
    $region81: #{combiner_forward.1} parent=1 // pred_fallthru
      _
    // Predicated region
    $region82: #{combiner_forward.1} parent=1 // pred_check
      _
    $region83: #{combiner_forward.1} parent=1 // pred_check_branch
      %75 = sbr.rel (0) target = $region85
    $region84: #{combiner_forward.1} parent=1 // pred_region
      %77 = dma.done [#allocation4], 32
    $region85: #{combiner_forward.1} parent=1 // pred_fallthru
      _
    %78 = sfence
    %v79 = vlaneseq
    %v80 = vshrl.u32 %v79, 7
    %v81 = vlaneseq
    %v82 = vand.u32 %v81, 127
    %s83 = sld [smem:[#allocation2]]
    %s84 = sld [smem:[#allocation2 + $0x80]]
    %v85 = vstv %s83
    %vm86 = vcmp.eq.s32.totalorder %v80, %v85
    %v87 = vstv %s84
    %vm88 = vcmp.eq.s32.totalorder %v82, %v87
    %vm89 = vmand %vm86, %vm88
    %v90 = vsel %vm89, 1, 0
    %v91 = vcvt.s32.f32 %v90
    %v92 = vmax.f32 %v91, 0.0
    %s93 = sld [smem:[#allocation2 + $0x1]]
    %s94 = sld [smem:[#allocation2 + $0x81]]
    %v95 = vstv %s93
    %vm96 = vcmp.eq.s32.totalorder %v80, %v95
    %v97 = vstv %s94
    %vm98 = vcmp.eq.s32.totalorder %v82, %v97
    %vm99 = vmand %vm96, %vm98
    %v100 = vsel %vm99, 1, 0
    %v101 = vcvt.s32.f32 %v100
    %v102 = vmax.f32 %v92, %v101
    %s103 = sld [smem:[#allocation2 + $0x2]]
    %s104 = sld [smem:[#allocation2 + $0x82]]
    %v105 = vstv %s103
    %vm106 = vcmp.eq.s32.totalorder %v80, %v105
    %v107 = vstv %s104
    %vm108 = vcmp.eq.s32.totalorder %v82, %v107
    %vm109 = vmand %vm106, %vm108
    %v110 = vsel %vm109, 1, 0
    %v111 = vcvt.s32.f32 %v110
    %v112 = vmax.f32 %v102, %v111
    %s113 = sld [smem:[#allocation2 + $0x3]]
    %s114 = sld [smem:[#allocation2 + $0x83]]
    %v115 = vstv %s113
    %vm116 = vcmp.eq.s32.totalorder %v80, %v115
    %v117 = vstv %s114
    %vm118 = vcmp.eq.s32.totalorder %v82, %v117
    %vm119 = vmand %vm116, %vm118
    %v120 = vsel %vm119, 1, 0
    %v121 = vcvt.s32.f32 %v120
    %v122 = vmax.f32 %v112, %v121
    %s123 = sld [smem:[#allocation2 + $0x4]]
    %s124 = sld [smem:[#allocation2 + $0x84]]
    %v125 = vstv %s123
    %vm126 = vcmp.eq.s32.totalorder %v80, %v125
    %v127 = vstv %s124
    %vm128 = vcmp.eq.s32.totalorder %v82, %v127
    %vm129 = vmand %vm126, %vm128
    %v130 = vsel %vm129, 1, 0
    %v131 = vcvt.s32.f32 %v130
    %v132 = vmax.f32 %v122, %v131
    %s133 = sld [smem:[#allocation2 + $0x5]]
    %s134 = sld [smem:[#allocation2 + $0x85]]
    %v135 = vstv %s133
    %vm136 = vcmp.eq.s32.totalorder %v80, %v135
    %v137 = vstv %s134
    %vm138 = vcmp.eq.s32.totalorder %v82, %v137
    %vm139 = vmand %vm136, %vm138
    %v140 = vsel %vm139, 1, 0
    %v141 = vcvt.s32.f32 %v140
    %v142 = vmax.f32 %v132, %v141
    %s143 = sld [smem:[#allocation2 + $0x6]]
    %s144 = sld [smem:[#allocation2 + $0x86]]
    %v145 = vstv %s143
    %vm146 = vcmp.eq.s32.totalorder %v80, %v145
    %v147 = vstv %s144
    %vm148 = vcmp.eq.s32.totalorder %v82, %v147
    %vm149 = vmand %vm146, %vm148
    %v150 = vsel %vm149, 1, 0
    %v151 = vcvt.s32.f32 %v150
    %v152 = vmax.f32 %v142, %v151
    %s153 = sld [smem:[#allocation2 + $0x7]]
    %s154 = sld [smem:[#allocation2 + $0x87]]
    %v155 = vstv %s153
    %vm156 = vcmp.eq.s32.totalorder %v80, %v155
    %v157 = vstv %s154
    %vm158 = vcmp.eq.s32.totalorder %v82, %v157
    %vm159 = vmand %vm156, %vm158
    %v160 = vsel %vm159, 1, 0
    %v161 = vcvt.s32.f32 %v160
    %v162 = vmax.f32 %v152, %v161
    %s163 = sld [smem:[#allocation2 + $0x8]]
    %s164 = sld [smem:[#allocation2 + $0x88]]
    %v165 = vstv %s163
    %vm166 = vcmp.eq.s32.totalorder %v80, %v165
    %v167 = vstv %s164
    %vm168 = vcmp.eq.s32.totalorder %v82, %v167
    %vm169 = vmand %vm166, %vm168
    %v170 = vsel %vm169, 1, 0
    %v171 = vcvt.s32.f32 %v170
    %v172 = vmax.f32 %v162, %v171
    %s173 = sld [smem:[#allocation2 + $0x9]]
    %s174 = sld [smem:[#allocation2 + $0x89]]
    %v175 = vstv %s173
    %vm176 = vcmp.eq.s32.totalorder %v80, %v175
    %v177 = vstv %s174
    %vm178 = vcmp.eq.s32.totalorder %v82, %v177
    %vm179 = vmand %vm176, %vm178
    %v180 = vsel %vm179, 1, 0
    %v181 = vcvt.s32.f32 %v180
    %v182 = vmax.f32 %v172, %v181
    %s183 = sld [smem:[#allocation2 + $0xa]]
    %s184 = sld [smem:[#allocation2 + $0x8a]]
    %v185 = vstv %s183
    %vm186 = vcmp.eq.s32.totalorder %v80, %v185
    %v187 = vstv %s184
    %vm188 = vcmp.eq.s32.totalorder %v82, %v187
    %vm189 = vmand %vm186, %vm188
    %v190 = vsel %vm189, 1, 0
    %v191 = vcvt.s32.f32 %v190
    %v192 = vmax.f32 %v182, %v191
    %s193 = sld [smem:[#allocation2 + $0xb]]
    %s194 = sld [smem:[#allocation2 + $0x8b]]
    %v195 = vstv %s193
    %vm196 = vcmp.eq.s32.totalorder %v80, %v195
    %v197 = vstv %s194
    %vm198 = vcmp.eq.s32.totalorder %v82, %v197
    %vm199 = vmand %vm196, %vm198
    %v200 = vsel %vm199, 1, 0
    %v201 = vcvt.s32.f32 %v200
    %v202 = vmax.f32 %v192, %v201
    %s203 = sld [smem:[#allocation2 + $0xc]]
    %s204 = sld [smem:[#allocation2 + $0x8c]]
    %v205 = vstv %s203
    %vm206 = vcmp.eq.s32.totalorder %v80, %v205
    %v207 = vstv %s204
    %vm208 = vcmp.eq.s32.totalorder %v82, %v207
    %vm209 = vmand %vm206, %vm208
    %v210 = vsel %vm209, 1, 0
    %v211 = vcvt.s32.f32 %v210
    %v212 = vmax.f32 %v202, %v211
    %s213 = sld [smem:[#allocation2 + $0xd]]
    %s214 = sld [smem:[#allocation2 + $0x8d]]
    %v215 = vstv %s213
    %vm216 = vcmp.eq.s32.totalorder %v80, %v215
    %v217 = vstv %s214
    %vm218 = vcmp.eq.s32.totalorder %v82, %v217
    %vm219 = vmand %vm216, %vm218
    %v220 = vsel %vm219, 1, 0
    %v221 = vcvt.s32.f32 %v220
    %v222 = vmax.f32 %v212, %v221
    %vm223 = vcmp.eq.s32.totalorder %v80, %v82
    %v224 = vsel %vm223, 1, 0
    %v225 = vcvt.s32.f32 %v224
    %v226 = vadd.f32 %v222, %v225
    %vm227 = vcmask 64512
    %v228 = vsel %vm227, %v226, 0.0
    %229 = vadd.xlane.f32.xlu0 %v228
    %v230 = vpop.xlane.xlu0 %229
    %v231 = vrot.slane %v228, 4
    %v232 = vadd.f32 %v228, %v231
    %v233 = vrot.slane %v232, 2
    %v234 = vadd.f32 %v232, %v233
    %v235 = vrot.slane %v234, 1
    %v236 = vadd.f32 %v234, %v235
    %v237 = vrsqrt.pop %v230
    %v238 = vmul.f32 %v237, %v230
    %v239 = vmul.f32 %v238, %v237
    %v240 = vmul.f32 0.5, %v239
    %v241 = vsub.f32 1.5, %v240
    %v242 = vmul.f32 %v237, %v241
    %vm243 = vweird.f32 %v230
    %vm244 = vweird.f32 %v237
    %vm245 = vmor %vm243, %vm244
    %v246 = vsel %vm245, %v237, %v242
    %v247 = vmul.f32 %v226, %v246
    %v248 = vrsqrt.pop %v236
    %v249 = vmul.f32 %v248, %v236
    %v250 = vmul.f32 %v249, %v248
    %v251 = vmul.f32 0.5, %v250
    %v252 = vsub.f32 1.5, %v251
    %v253 = vmul.f32 %v248, %v252
    %vm254 = vweird.f32 %v236
    %vm255 = vweird.f32 %v248
    %vm256 = vmor %vm254, %vm255
    %v257 = vsel %vm256, %v248, %v253
    %v258 = vmul.f32 %v247, %v257
    %v259 = vld [vmem:[%s1] sm:$0xff]
    %v261 = vsel %vm227, %v258, 0
    %263 = vmatpush.msra.mxu0 0.0
    %264 = vmatpush.msra.mxu0 0.0
    %265 = vmatpush.msra.mxu0 0.0
    %266 = vmatpush.msra.mxu0 0.0
    %267 = vmatpush.msra.mxu0 0.0
    %268 = vmatpush.msra.mxu0 0.0
    %269 = vmatpush.msra.mxu0 0.0
    %270 = vmatpush.msra.mxu0 0.0
    %271 = vmatpush.msra.mxu0 0.0
    %272 = vmatpush.msra.mxu0 0.0
    %273 = vmatpush.msra.mxu0 0.0
    %274 = vmatpush.msra.mxu0 0.0
    %275 = vmatpush.msra.mxu0 0.0
    %276 = vmatpush.msra.mxu0 0.0
    %277 = vmatpush.msra.mxu0 0.0
    %278 = vmatpush.msra.mxu0 %v259
    %279 = vmatmul.f32.gmra.mxu0 %v261
    %v280 = vpop.f32.mrf.mxu0
    %v281 = vadd.f32 0.0, %v280
    %282 = vdwg.mxu0
    %v283 = vld [vmem:[%s4] sm:$0xff]
    %v284 = vld [vmem:[%s4 + $0x8] sm:$0xff]
    %v285 = vld [vmem:[%s5] sm:$0x1]
    %v287 = vperm.slane %v285, 0
    %vm289 = vcmask 130048
    %v291 = vsel %vm289, %v281, 0
    %293 = vmatpush.msra.mxu0 0.0
    %294 = vmatpush.msra.mxu0 0.0
    %295 = vmatpush.msra.mxu0 0.0
    %296 = vmatpush.msra.mxu0 0.0
    %297 = vmatpush.msra.mxu0 0.0
    %298 = vmatpush.msra.mxu0 0.0
    %299 = vmatpush.msra.mxu0 0.0
    %300 = vmatpush.msra.mxu0 0.0
    %301 = vmatpush.msra.mxu0 0.0
    %302 = vmatpush.msra.mxu0 0.0
    %303 = vmatpush.msra.mxu0 0.0
    %304 = vmatpush.msra.mxu0 0.0
    %305 = vmatpush.msra.mxu0 0.0
    %306 = vmatpush.msra.mxu0 0.0
    %307 = vmatpush.msra.mxu0 %v284
    %308 = vmatpush.msra.mxu0 %v283
    %309 = vmatmul.f32.gmra.mxu0 %v291
    %v310 = vpop.f32.mrf.mxu0
    %v311 = vadd.f32 %v287, %v310
    %312 = vdwg.mxu0
    %v313 = vmax.f32 %v311, 0.0
    %314 = vmatpush.msra.mxu0 0.0
    %315 = vmatpush.msra.mxu0 0.0
    %316 = vmatpush.msra.mxu0 0.0
    %317 = vmatpush.msra.mxu0 0.0
    %318 = vmatpush.msra.mxu0 0.0
    %319 = vmatpush.msra.mxu0 0.0
    %320 = vmatpush.msra.mxu0 0.0
    %321 = vmatpush.msra.mxu0 0.0
    %322 = vmatpush.msra.mxu0 0.0
    %323 = vmatpush.msra.mxu0 0.0
    %324 = vmatpush.msra.mxu0 0.0
    %325 = vmatpush.msra.mxu0 0.0
    %326 = vmatpush.msra.mxu0 0.0
    %327 = vmatpush.msra.mxu0 0.0
    %328 = vmatpush.msra.mxu0 0.0
    %329 = vmatpush.msra.mxu0 %v313
    %330 = vmatmul.f32.gmra.mxu0 %v261
    %v331 = vpop.f32.mrf.mxu0
    %v332 = vadd.f32 0.0, %v331
    %333 = vdwg.mxu0
    %v334 = vld [vmem:[%s6] sm:$0xff]
    %v335 = vld [vmem:[%s6 + $0x8] sm:$0xff]
    %v336 = vld [vmem:[%s6 + $0x10] sm:$0xff]
    %v337 = vld [vmem:[%s6 + $0x18] sm:$0xff]
    %v338 = vld [vmem:[%s7] sm:$0x1]
    %v340 = vperm.slane %v338, 0
    %vm342 = vcmask 261120
    %v344 = vsel %vm342, %v332, 0
    %346 = vmatpush.msra.mxu0 0.0
    %347 = vmatpush.msra.mxu0 0.0
    %348 = vmatpush.msra.mxu0 0.0
    %349 = vmatpush.msra.mxu0 0.0
    %350 = vmatpush.msra.mxu0 0.0
    %351 = vmatpush.msra.mxu0 0.0
    %352 = vmatpush.msra.mxu0 0.0
    %353 = vmatpush.msra.mxu0 0.0
    %354 = vmatpush.msra.mxu0 0.0
    %355 = vmatpush.msra.mxu0 0.0
    %356 = vmatpush.msra.mxu0 0.0
    %357 = vmatpush.msra.mxu0 0.0
    %358 = vmatpush.msra.mxu0 %v337
    %359 = vmatpush.msra.mxu0 %v336
    %360 = vmatpush.msra.mxu0 %v335
    %361 = vmatpush.msra.mxu0 %v334
    %362 = vmatmul.f32.gmra.mxu0 %v344
    %v363 = vpop.f32.mrf.mxu0
    %v364 = vadd.f32 %v340, %v363
    %365 = vdwg.mxu0
    %v366 = vmax.f32 %v364, 0.0
    %v368 = vsel %vm227, 0.125, 0
    %370 = vmatpush.msra.mxu0 0.0
    %371 = vmatpush.msra.mxu0 0.0
    %372 = vmatpush.msra.mxu0 0.0
    %373 = vmatpush.msra.mxu0 0.0
    %374 = vmatpush.msra.mxu0 0.0
    %375 = vmatpush.msra.mxu0 0.0
    %376 = vmatpush.msra.mxu0 0.0
    %377 = vmatpush.msra.mxu0 0.0
    %378 = vmatpush.msra.mxu0 0.0
    %379 = vmatpush.msra.mxu0 0.0
    %380 = vmatpush.msra.mxu0 0.0
    %381 = vmatpush.msra.mxu0 0.0
    %382 = vmatpush.msra.mxu0 0.0
    %383 = vmatpush.msra.mxu0 0.0
    %384 = vmatpush.msra.mxu0 0.0
    %385 = vmatpush.msra.mxu0 %v366
    %386 = vmatmul.f32.gmra.mxu0 %v368
    %v387 = vpop.f32.mrf.mxu0
    %v388 = vadd.f32 0.0, %v387
    %389 = vdwg.mxu0
    %v390 = vld [vmem:[%s2] sm:$0x1]
    %v391 = vld [vmem:[%s8] sm:$0xff]
    %v392 = vld [vmem:[%s8 + $0x8] sm:$0xff]
    %v393 = vld [vmem:[%s8 + $0x10] sm:$0xff]
    %v394 = vld [vmem:[%s8 + $0x18] sm:$0xff]
    %v395 = vld [vmem:[%s8 + $0x20] sm:$0xff]
    %v396 = vld [vmem:[%s8 + $0x28] sm:$0xff]
    %v397 = vld [vmem:[%s8 + $0x30] sm:$0xff]
    %v398 = vld [vmem:[%s8 + $0x38] sm:$0xff]
    %v399 = vld [vmem:[%s9] sm:$0x1]
    %vm400 = vcmask 523264
    %v402 = vsel %vm400, %v390, 0
    %404 = vmatpush.msra.mxu0 0.0
    %405 = vmatpush.msra.mxu0 0.0
    %406 = vmatpush.msra.mxu0 0.0
    %407 = vmatpush.msra.mxu0 0.0
    %408 = vmatpush.msra.mxu0 0.0
    %409 = vmatpush.msra.mxu0 0.0
    %410 = vmatpush.msra.mxu0 0.0
    %411 = vmatpush.msra.mxu0 0.0
    %412 = vmatpush.msra.mxu0 %v398
    %413 = vmatpush.msra.mxu0 %v397
    %414 = vmatpush.msra.mxu0 %v396
    %415 = vmatpush.msra.mxu0 %v395
    %416 = vmatpush.msra.mxu0 %v394
    %417 = vmatpush.msra.mxu0 %v393
    %418 = vmatpush.msra.mxu0 %v392
    %419 = vmatpush.msra.mxu0 %v391
    %420 = vmatmul.f32.gmra.mxu0 %v402
    %v421 = vpop.f32.mrf.mxu0
    %v422 = vadd.f32 %v399, %v421
    %423 = vdwg.mxu0
    %v424 = vmax.f32 %v422, 0.0
    %v425 = vld [vmem:[%s10] sm:$0xff]
    %v426 = vld [vmem:[%s10 + $0x8] sm:$0xff]
    %v427 = vld [vmem:[%s10 + $0x10] sm:$0xff]
    %v428 = vld [vmem:[%s10 + $0x18] sm:$0xff]
    %v429 = vld [vmem:[%s11] sm:$0x1]
    %v431 = vsel %vm342, %v424, 0
    %433 = vmatpush.msra.mxu0 0.0
    %434 = vmatpush.msra.mxu0 0.0
    %435 = vmatpush.msra.mxu0 0.0
    %436 = vmatpush.msra.mxu0 0.0
    %437 = vmatpush.msra.mxu0 0.0
    %438 = vmatpush.msra.mxu0 0.0
    %439 = vmatpush.msra.mxu0 0.0
    %440 = vmatpush.msra.mxu0 0.0
    %441 = vmatpush.msra.mxu0 0.0
    %442 = vmatpush.msra.mxu0 0.0
    %443 = vmatpush.msra.mxu0 0.0
    %444 = vmatpush.msra.mxu0 0.0
    %445 = vmatpush.msra.mxu0 %v428
    %446 = vmatpush.msra.mxu0 %v427
    %447 = vmatpush.msra.mxu0 %v426
    %448 = vmatpush.msra.mxu0 %v425
    %449 = vmatmul.f32.gmra.mxu0 %v431
    %v450 = vpop.f32.mrf.mxu0
    %v451 = vadd.f32 %v429, %v450
    %452 = vdwg.mxu0
    %v453 = vmax.f32 %v451, 0.0
    %v454 = vld [vmem:[%s12] sm:$0xff]
    %v455 = vld [vmem:[%s12 + $0x8] sm:$0xff]
    %v456 = vld [vmem:[%s13] sm:$0xff]
    %v457 = vld [vmem:[%s13 + $0x8] sm:$0xff]
    %v458 = vld [vmem:[%s13 + $0x10] sm:$0xff]
    %v459 = vld [vmem:[%s13 + $0x18] sm:$0xff]
    %v461 = vsel %vm342, %v388, 0
    %463 = vmatpush.msra.mxu0 0.0
    %464 = vmatpush.msra.mxu0 0.0
    %465 = vmatpush.msra.mxu0 0.0
    %466 = vmatpush.msra.mxu0 0.0
    %467 = vmatpush.msra.mxu0 0.0
    %468 = vmatpush.msra.mxu0 0.0
    %469 = vmatpush.msra.mxu0 0.0
    %470 = vmatpush.msra.mxu0 0.0
    %471 = vmatpush.msra.mxu0 0.0
    %472 = vmatpush.msra.mxu0 0.0
    %473 = vmatpush.msra.mxu0 0.0
    %474 = vmatpush.msra.mxu0 0.0
    %475 = vmatpush.msra.mxu0 %v459
    %476 = vmatpush.msra.mxu0 %v458
    %477 = vmatpush.msra.mxu0 %v457
    %478 = vmatpush.msra.mxu0 %v456
    %479 = vmatmul.f32.gmra.mxu0 %v461
    %v480 = vpop.f32.mrf.mxu0
    %v481 = vadd.f32 0.0, %v480
    %482 = vdwg.mxu0
    %v484 = vsel %vm289, %v453, 0
    %486 = vmatpush.msra.mxu0 0.0
    %487 = vmatpush.msra.mxu0 0.0
    %488 = vmatpush.msra.mxu0 0.0
    %489 = vmatpush.msra.mxu0 0.0
    %490 = vmatpush.msra.mxu0 0.0
    %491 = vmatpush.msra.mxu0 0.0
    %492 = vmatpush.msra.mxu0 0.0
    %493 = vmatpush.msra.mxu0 0.0
    %494 = vmatpush.msra.mxu0 0.0
    %495 = vmatpush.msra.mxu0 0.0
    %496 = vmatpush.msra.mxu0 0.0
    %497 = vmatpush.msra.mxu0 0.0
    %498 = vmatpush.msra.mxu0 0.0
    %499 = vmatpush.msra.mxu0 0.0
    %500 = vmatpush.msra.mxu0 %v455
    %501 = vmatpush.msra.mxu0 %v454
    %502 = vmatmul.f32.gmra.mxu0 %v484
    %v503 = vpop.f32.mrf.mxu0
    %v504 = vadd.f32 %v481, %v503
    %505 = vdwg.mxu0
    %v506 = vld [vmem:[%s3] sm:$0x1]
    %v507 = vld [vmem:[%s14] sm:$0xff]
    %v509 = vsel %vm227, %v506, 0
    %511 = vmatpush.msra.mxu0 0.0
    %512 = vmatpush.msra.mxu0 0.0
    %513 = vmatpush.msra.mxu0 0.0
    %514 = vmatpush.msra.mxu0 0.0
    %515 = vmatpush.msra.mxu0 0.0
    %516 = vmatpush.msra.mxu0 0.0
    %517 = vmatpush.msra.mxu0 0.0
    %518 = vmatpush.msra.mxu0 0.0
    %519 = vmatpush.msra.mxu0 0.0
    %520 = vmatpush.msra.mxu0 0.0
    %521 = vmatpush.msra.mxu0 0.0
    %522 = vmatpush.msra.mxu0 0.0
    %523 = vmatpush.msra.mxu0 0.0
    %524 = vmatpush.msra.mxu0 0.0
    %525 = vmatpush.msra.mxu0 0.0
    %526 = vmatpush.msra.mxu0 %v507
    %527 = vmatmul.f32.gmra.mxu0 %v509
    %v528 = vpop.f32.mrf.mxu0
    %v529 = vadd.f32 0.0, %v528
    %530 = vdwg.mxu0
    %v531 = vadd.f32 %v504, %v529
    %v532 = vld [vmem:[%s15] sm:$0x1]
    %v533 = vadd.f32 %v531, %v532
    %v534 = vmax.f32 %v533, 0.0
    %v535 = vld [vmem:[%s16] sm:$0xff]
    %v536 = vld [vmem:[%s16 + $0x8] sm:$0xff]
    %v537 = vld [vmem:[%s16 + $0x10] sm:$0xff]
    %v538 = vld [vmem:[%s16 + $0x18] sm:$0xff]
    %v539 = vld [vmem:[%s17] sm:$0x1]
    %v541 = vsel %vm342, %v534, 0
    %543 = vmatpush.msra.mxu0 0.0
    %544 = vmatpush.msra.mxu0 0.0
    %545 = vmatpush.msra.mxu0 0.0
    %546 = vmatpush.msra.mxu0 0.0
    %547 = vmatpush.msra.mxu0 0.0
    %548 = vmatpush.msra.mxu0 0.0
    %549 = vmatpush.msra.mxu0 0.0
    %550 = vmatpush.msra.mxu0 0.0
    %551 = vmatpush.msra.mxu0 0.0
    %552 = vmatpush.msra.mxu0 0.0
    %553 = vmatpush.msra.mxu0 0.0
    %554 = vmatpush.msra.mxu0 0.0
    %555 = vmatpush.msra.mxu0 %v538
    %556 = vmatpush.msra.mxu0 %v537
    %557 = vmatpush.msra.mxu0 %v536
    %558 = vmatpush.msra.mxu0 %v535
    %559 = vmatmul.f32.gmra.mxu0 %v541
    %v560 = vpop.f32.mrf.mxu0
    %v561 = vadd.f32 %v539, %v560
    %562 = vdwg.mxu0
    %v563 = vmax.f32 %v561, 0.0
    %v564 = vld [vmem:[%s18] sm:$0xff]
    %v565 = vld [vmem:[%s18 + $0x8] sm:$0xff]
    %v566 = vld [vmem:[%s19] sm:$0x1]
    %v568 = vsel %vm289, %v563, 0
    %570 = vmatpush.msra.mxu0 0.0
    %571 = vmatpush.msra.mxu0 0.0
    %572 = vmatpush.msra.mxu0 0.0
    %573 = vmatpush.msra.mxu0 0.0
    %574 = vmatpush.msra.mxu0 0.0
    %575 = vmatpush.msra.mxu0 0.0
    %576 = vmatpush.msra.mxu0 0.0
    %577 = vmatpush.msra.mxu0 0.0
    %578 = vmatpush.msra.mxu0 0.0
    %579 = vmatpush.msra.mxu0 0.0
    %580 = vmatpush.msra.mxu0 0.0
    %581 = vmatpush.msra.mxu0 0.0
    %582 = vmatpush.msra.mxu0 0.0
    %583 = vmatpush.msra.mxu0 0.0
    %584 = vmatpush.msra.mxu0 %v565
    %585 = vmatpush.msra.mxu0 %v564
    %586 = vmatmul.f32.gmra.mxu0 %v568
    %v587 = vpop.f32.mrf.mxu0
    %v588 = vadd.f32 %v566, %v587
    %589 = vdwg.mxu0
    %vm590 = vcmask 32768
    %591 = vst.msk [vmem:[#allocation5] sm:$0x1] %vm590, %v588
    // Predicated region
    $region86: #{combiner_forward.1} parent=1 // pred_check
      _
    $region87: #{combiner_forward.1} parent=1 // pred_check_branch
      %593 = sbr.rel (0) target = $region89
    $region88: #{combiner_forward.1} parent=1 // pred_region
      %595 = vsyncadd [#allocation3], 0
      %s597 = sshll.u32 [#allocation5], 4
      %s598 = int_to_ptr.vmem [resolvable:$true] %s597
      %s599 = sshll.u32 %s20, 4
      %s600 = int_to_ptr.hbm [resolvable:$true] %s599
      %602 = dma.vmem_to_hbm [thread:$0]  %s598, 16, %s600, [#allocation3]
    $region89: #{combiner_forward.1} parent=1 // pred_fallthru
      _
    // Predicated region
    $region90: #{combiner_forward.1} parent=1 // pred_check
      _
    $region91: #{combiner_forward.1} parent=1 // pred_check_branch
      %604 = sbr.rel (0) target = $region93
    $region92: #{combiner_forward.1} parent=1 // pred_region
      %606 = dma.done [#allocation3], 16
    $region93: #{combiner_forward.1} parent=1 // pred_fallthru
      _
    %607 = vsyncpa [#allocation3], 1
    %608 = vsyncpa [#allocation4], 1

</llo_original>
